<compile_context>
chip_gen: v5e
topology: v5e:2x2
jax: 0.10.0
libtpu: 0.0.40
codegen_flags: <defaults>
</compile_context>

<pallas_src>
import functools
import math

import jax
import jax.numpy as jnp
from jax.experimental import pallas as pl
from jax.experimental.pallas import tpu as pltpu


_SQRT_HALF = 1.0 / math.sqrt(2.0)


def _round_up(x, m):
    return ((x + m - 1) // m) * m


def _gelu_exact(x):
    # Exact GELU: x * 0.5 * (1 + erf(x / sqrt(2)))  (matches torch.nn.GELU())
    return 0.5 * x * (1.0 + jax.lax.erf(x * _SQRT_HALF))


def _make_head_kernel(num_class: int, padded_class: int):
    def kernel(x_ref, w1_ref, b1_ref, w2_ref, b2_ref, o_ref):
        # x_ref: (TB, d_model) compute_dtype      w1_ref: (d_model, H) compute_dtype
        # b1_ref: (1, H) f32                      w2_ref: (H, C_pad) compute_dtype
        # b2_ref: (1, C_pad) f32                  o_ref : (TB, C_pad) f32
        x = x_ref[...]

        # mlp1 + GELU (dropout == identity at inference); f32 accumulate/bias.
        h = jnp.dot(x, w1_ref[...], preferred_element_type=jnp.float32) + b1_ref[...]
        h = _gelu_exact(h)

        # mlp2 + GELU; feed the MXU in the (possibly bf16) compute dtype.
        h = h.astype(w2_ref.dtype)
        logits = jnp.dot(h, w2_ref[...], preferred_element_type=jnp.float32) + b2_ref[...]
        logits = _gelu_exact(logits)

        # Mask padded class lanes AFTER the GELU, BEFORE the softmax max/exp.
        if padded_class != num_class:  # static Python branch
            lane = jax.lax.broadcasted_iota(jnp.int32, logits.shape, 1)
            logits = jnp.where(lane < num_class, logits, -1e30)

        # Numerically stable softmax; EUP approx reciprocal for the denom.
        m = jnp.max(logits, axis=-1, keepdims=True)
        e = jnp.exp(logits - m)
        denom = jnp.sum(e, axis=-1, keepdims=True)
        o_ref[...] = (e * pl.reciprocal(denom, approx=True)).astype(o_ref.dtype)

    return kernel


def classification_head(x, w1, b1, w2, b2, *, compute_dtype=jnp.bfloat16,
                        batch_tile=256):
    """ViT classification head forward.

    x: (B, S, d_model) f32; w1: (d_model, 4*d_model); b1: (4*d_model,)
    w2: (4*d_model, num_class); b2: (num_class,)
    Returns (B, num_class) f32 class probabilities.
    """
    B = x.shape[0]
    d_model = x.shape[-1]
    hidden = w1.shape[1]
    num_class = w2.shape[1]

    # CLS-token slice (cheap strided read; see TODO above about in-kernel fusion).
    cls = x[:, 0, :]

    # --- TPU-friendly padding ------------------------------------------------
    tb = min(batch_tile, _round_up(B, 8))       # f32 sublane multiple
    b_pad = _round_up(B, tb)
    c_pad = _round_up(num_class, 128)           # lane-dense output / full MXU N

    if b_pad != B:
        cls = jnp.pad(cls, ((0, b_pad - B), (0, 0)))
    w2p = jnp.pad(w2, ((0, 0), (0, c_pad - num_class))) if c_pad != num_class else w2
    b2p = jnp.pad(b2, (0, c_pad - num_class)) if c_pad != num_class else b2

    # bf16 weights/activations halve weight HBM traffic; biases stay f32.
    cls_c = cls.astype(compute_dtype)
    w1_c = w1.astype(compute_dtype)
    w2_c = w2p.astype(compute_dtype)
    b1_c = b1.reshape(1, hidden).astype(jnp.float32)
    b2_c = b2p.reshape(1, c_pad).astype(jnp.float32)

    grid = (b_pad // tb,)

    def _nbytes(a):
        return int(a.size) * jnp.dtype(a.dtype).itemsize

    in_bytes = sum(_nbytes(a) for a in (cls_c, w1_c, b1_c, w2_c, b2_c))
    out_bytes = b_pad * c_pad * 4
    item = jnp.dtype(compute_dtype).itemsize
    # Resident weights/biases + double-buffered activation and output tiles.
    vmem_needed = (_nbytes(w1_c) + _nbytes(w2_c) + _nbytes(b1_c) + _nbytes(b2_c)
                   + 2 * (tb * d_model * item + tb * c_pad * 4))
    vmem_limit = int(min(64 * 1024 * 1024,          # stay inside v7x physical VMEM
                         max(2 * vmem_needed, 8 * 1024 * 1024)))

    cost = pl.CostEstimate(
        flops=2 * b_pad * d_model * hidden + 2 * b_pad * hidden * c_pad,
        transcendentals=b_pad * (hidden + 2 * c_pad),   # erf, erf, exp
        bytes_accessed=in_bytes + out_bytes,
    )

    out = pl.pallas_call(
        _make_head_kernel(num_class, c_pad),
        out_shape=jax.ShapeDtypeStruct((b_pad, c_pad), jnp.float32),
        grid=grid,
        in_specs=[
            pl.BlockSpec((tb, d_model), lambda i: (i, 0)),       # x tile (pipelined)
            pl.BlockSpec((d_model, hidden), lambda i: (0, 0)),   # w1 (VMEM-resident)
            pl.BlockSpec((1, hidden), lambda i: (0, 0)),         # b1 (resident)
            pl.BlockSpec((hidden, c_pad), lambda i: (0, 0)),     # w2 (resident)
            pl.BlockSpec((1, c_pad), lambda i: (0, 0)),          # b2 (resident)
        ],
        out_specs=pl.BlockSpec((tb, c_pad), lambda i: (i, 0)),
        compiler_params=pltpu.CompilerParams(
            dimension_semantics=("parallel",),   # shard batch tiles across cores
            vmem_limit_bytes=vmem_limit,
        ),
        cost_estimate=cost,
    )(cls_c, w1_c, b1_c, w2_c, b2_c)

    return out[:B, :num_class]


def _init_linear(key, fan_in, fan_out):
    # Deterministic init mimicking PyTorch's default U(-1/sqrt(fan_in), +1/sqrt(fan_in)).
    kw, kb = jax.random.split(key)
    bound = 1.0 / math.sqrt(fan_in)
    w = jax.random.uniform(kw, (fan_in, fan_out), jnp.float32, -bound, bound)
    b = jax.random.uniform(kb, (fan_out,), jnp.float32, -bound, bound)
    return w, b


if __name__ == "__main__":
    # Small, module-consistent shapes.
    B, S, d_model, num_class = 2, 8, 32, 10
    hidden = 4 * d_model  # 128

    root = jax.random.PRNGKey(0)
    kx, k1, k2 = jax.random.split(root, 3)

    x = jax.random.normal(kx, (B, S, d_model), jnp.float32)
    w1, b1 = _init_linear(k1, d_model, hidden)       # mlp1: d_model -> 4*d_model
    w2, b2 = _init_linear(k2, hidden, num_class)     # mlp2: 4*d_model -> num_class

    def _ref(compute_dtype):
        # Pure-JAX reference mirroring the kernel's cast points.
        cls = x[:, 0, :].astype(compute_dtype).astype(jnp.float32)
        w1c = w1.astype(compute_dtype).astype(jnp.float32)
        w2c = w2.astype(compute_dtype).astype(jnp.float32)
        h = jax.nn.gelu(cls @ w1c + b1, approximate=False)
        h = h.astype(compute_dtype).astype(jnp.float32)
        logits = jax.nn.gelu(h @ w2c + b2, approximate=False)
        return jax.nn.softmax(logits, axis=-1)

    # f32 compute path (precision check).
    out_f32 = jax.block_until_ready(
        classification_head(x, w1, b1, w2, b2, compute_dtype=jnp.float32))
    ref_f32 = _ref(jnp.float32)
    assert out_f32.shape == (B, num_class)
    assert jnp.allclose(out_f32, ref_f32, atol=2e-3, rtol=2e-3)
    assert jnp.allclose(jnp.sum(out_f32, axis=-1), 1.0, atol=2e-3)

    # Default bandwidth-optimized bf16 weight/activation path.
    out_bf16 = jax.block_until_ready(classification_head(x, w1, b1, w2, b2))
    ref_bf16 = _ref(jnp.bfloat16)
    assert out_bf16.shape == (B, num_class)
    assert jnp.allclose(out_bf16, ref_bf16, atol=5e-3, rtol=5e-3)
    assert jnp.allclose(jnp.sum(out_bf16, axis=-1), 1.0, atol=5e-3)

    print("KERNEL_OK")
</pallas_src>

<mosaic_0001>
module attributes {stable_mosaic.version = 11 : i64} {
  func.func @kernel(%arg0: i32, %arg1: memref<8x32xf32, #tpu.memory_space<vmem>>, %arg2: memref<32x128xf32, #tpu.memory_space<vmem>>, %arg3: memref<1x128xf32, #tpu.memory_space<vmem>>, %arg4: memref<128x128xf32, #tpu.memory_space<vmem>>, %arg5: memref<1x128xf32, #tpu.memory_space<vmem>>, %arg6: memref<8x128xf32, #tpu.memory_space<vmem>>) attributes {dimension_semantics = [#tpu.dimension_semantics<parallel>], iteration_bounds = array<i64: 1>, scalar_prefetch = 0 : i64, scratch_operands = 0 : i64, tpu.core_type = #tpu.core_type<tc>, window_params = [{transform_indices = @transform_0, window_bounds = array<i64: 8, 32>}, {pipeline_mode = #tpu.pipeline_mode<synchronous>, transform_indices = @transform_1, window_bounds = array<i64: 32, 128>}, {pipeline_mode = #tpu.pipeline_mode<synchronous>, transform_indices = @transform_2, window_bounds = array<i64: 1, 128>}, {pipeline_mode = #tpu.pipeline_mode<synchronous>, transform_indices = @transform_3, window_bounds = array<i64: 128, 128>}, {pipeline_mode = #tpu.pipeline_mode<synchronous>, transform_indices = @transform_4, window_bounds = array<i64: 1, 128>}, {transform_indices = @transform_5, window_bounds = array<i64: 8, 128>}]} {
    %c0 = arith.constant 0 : index
    %c0_0 = arith.constant 0 : index
    %0 = vector.load %arg1[%c0, %c0_0] : memref<8x32xf32, #tpu.memory_space<vmem>>, vector<8x32xf32>
    %c0_1 = arith.constant 0 : index
    %c0_2 = arith.constant 0 : index
    %1 = vector.load %arg2[%c0_1, %c0_2] : memref<32x128xf32, #tpu.memory_space<vmem>>, vector<32x128xf32>
    %cst = arith.constant dense<0.000000e+00> : vector<8x128xf32>
    %2 = tpu.matmul %0, %1, %cst {dimension_numbers = #tpu.dot_dimension_numbers<[1], [0], [0], [1], [0, 0, 1, 1], [], []>} : vector<8x32xf32>, vector<32x128xf32>, vector<8x128xf32> -> vector<8x128xf32>
    %c0_3 = arith.constant 0 : index
    %c0_4 = arith.constant 0 : index
    %3 = vector.load %arg3[%c0_3, %c0_4] : memref<1x128xf32, #tpu.memory_space<vmem>>, vector<1x128xf32>
    %4 = vector.broadcast %3 : vector<1x128xf32> to vector<8x128xf32>
    %5 = arith.addf %2, %4 : vector<8x128xf32>
    %cst_5 = arith.constant 5.000000e-01 : f32
    %6 = vector.broadcast %cst_5 : f32 to vector<8x128xf32>
    %7 = arith.mulf %6, %5 : vector<8x128xf32>
    %cst_6 = arith.constant 0.707106769 : f32
    %8 = vector.broadcast %cst_6 : f32 to vector<8x128xf32>
    %9 = arith.mulf %5, %8 : vector<8x128xf32>
    %10 = math.erf %9 : vector<8x128xf32>
    %cst_7 = arith.constant 1.000000e+00 : f32
    %11 = vector.broadcast %cst_7 : f32 to vector<8x128xf32>
    %12 = arith.addf %11, %10 : vector<8x128xf32>
    %13 = arith.mulf %7, %12 : vector<8x128xf32>
    %c0_8 = arith.constant 0 : index
    %c0_9 = arith.constant 0 : index
    %14 = vector.load %arg4[%c0_8, %c0_9] : memref<128x128xf32, #tpu.memory_space<vmem>>, vector<128x128xf32>
    %cst_10 = arith.constant dense<0.000000e+00> : vector<8x128xf32>
    %15 = tpu.matmul %13, %14, %cst_10 {dimension_numbers = #tpu.dot_dimension_numbers<[1], [0], [0], [1], [0, 0, 1, 1], [], []>} : vector<8x128xf32>, vector<128x128xf32>, vector<8x128xf32> -> vector<8x128xf32>
    %c0_11 = arith.constant 0 : index
    %c0_12 = arith.constant 0 : index
    %16 = vector.load %arg5[%c0_11, %c0_12] : memref<1x128xf32, #tpu.memory_space<vmem>>, vector<1x128xf32>
    %17 = vector.broadcast %16 : vector<1x128xf32> to vector<8x128xf32>
    %18 = arith.addf %15, %17 : vector<8x128xf32>
    %cst_13 = arith.constant 5.000000e-01 : f32
    %19 = vector.broadcast %cst_13 : f32 to vector<8x128xf32>
    %20 = arith.mulf %19, %18 : vector<8x128xf32>
    %cst_14 = arith.constant 0.707106769 : f32
    %21 = vector.broadcast %cst_14 : f32 to vector<8x128xf32>
    %22 = arith.mulf %18, %21 : vector<8x128xf32>
    %23 = math.erf %22 : vector<8x128xf32>
    %cst_15 = arith.constant 1.000000e+00 : f32
    %24 = vector.broadcast %cst_15 : f32 to vector<8x128xf32>
    %25 = arith.addf %24, %23 : vector<8x128xf32>
    %26 = arith.mulf %20, %25 : vector<8x128xf32>
    %27 = tpu.iota {dimensions = array<i32: 1>} : vector<8x128xi32>
    %c10_i32 = arith.constant 10 : i32
    %28 = vector.broadcast %c10_i32 : i32 to vector<8x128xi32>
    %29 = arith.cmpi slt, %27, %28 : vector<8x128xi32>
    %cst_16 = arith.constant -1.000000e+30 : f32
    %30 = vector.broadcast %cst_16 : f32 to vector<8x128xf32>
    %31 = arith.select %29, %26, %30 : vector<8x128xi1>, vector<8x128xf32>
    %cst_17 = arith.constant dense<0xFF800000> : vector<8xf32>
    %32 = vector.multi_reduction <maximumf>, %31, %cst_17 [1] : vector<8x128xf32> to vector<8xf32>
    %33 = vector.shape_cast %32 : vector<8xf32> to vector<8x1xf32>
    %34 = vector.broadcast %33 : vector<8x1xf32> to vector<8x128xf32>
    %35 = arith.subf %31, %34 : vector<8x128xf32>
    %36 = math.exp %35 : vector<8x128xf32>
    %cst_18 = arith.constant dense<0.000000e+00> : vector<8xf32>
    %37 = vector.multi_reduction <add>, %36, %cst_18 [1] : vector<8x128xf32> to vector<8xf32>
    %38 = vector.shape_cast %37 : vector<8xf32> to vector<8x1xf32>
    %39 = tpu.reciprocal %38 {approx = true} : vector<8x1xf32> -> vector<8x1xf32>
    %40 = vector.broadcast %39 : vector<8x1xf32> to vector<8x128xf32>
    %41 = arith.mulf %36, %40 : vector<8x128xf32>
    %c0_19 = arith.constant 0 : index
    %c0_20 = arith.constant 0 : index
    %42 = vector.load %arg6[%c0_19, %c0_20] : memref<8x128xf32, #tpu.memory_space<vmem>>, vector<8x128xf32>
    tpu.vector_store %arg6[%c0_19, %c0_20], %41 {strides = array<i32>} : memref<8x128xf32, #tpu.memory_space<vmem>>, vector<8x128xf32>,
    return
  }
  func.func @transform_0(%arg0: i32) -> (i32, i32) {
    %c0_i32 = arith.constant 0 : i32
    %c0_i32_0 = arith.constant 0 : i32
    return %arg0, %c0_i32 : i32, i32
  }
  func.func @transform_1(%arg0: i32) -> (i32, i32) {
    %c0_i32 = arith.constant 0 : i32
    %c0_i32_0 = arith.constant 0 : i32
    %c0_i32_1 = arith.constant 0 : i32
    return %c0_i32, %c0_i32_0 : i32, i32
  }
  func.func @transform_2(%arg0: i32) -> (i32, i32) {
    %c0_i32 = arith.constant 0 : i32
    %c0_i32_0 = arith.constant 0 : i32
    %c0_i32_1 = arith.constant 0 : i32
    return %c0_i32, %c0_i32_0 : i32, i32
  }
  func.func @transform_3(%arg0: i32) -> (i32, i32) {
    %c0_i32 = arith.constant 0 : i32
    %c0_i32_0 = arith.constant 0 : i32
    %c0_i32_1 = arith.constant 0 : i32
    return %c0_i32, %c0_i32_0 : i32, i32
  }
  func.func @transform_4(%arg0: i32) -> (i32, i32) {
    %c0_i32 = arith.constant 0 : i32
    %c0_i32_0 = arith.constant 0 : i32
    %c0_i32_1 = arith.constant 0 : i32
    return %c0_i32, %c0_i32_0 : i32, i32
  }
  func.func @transform_5(%arg0: i32) -> (i32, i32) {
    %c0_i32 = arith.constant 0 : i32
    %c0_i32_0 = arith.constant 0 : i32
    return %arg0, %c0_i32 : i32, i32
  }
}

</mosaic_0001>

<llo_original>
// kernel: tpu_custom_call.1
$region0: #{tpu_custom_call.1}
  #allocation0 [shape = 'u32[]', space=smem, size = 0x4, offset = 0x4, fixed_abs, tag = 'smem constant byte address 0x4 - core index']
  #allocation1 [shape = 'u32[72,128]{1,0:T(1,128)}', space=vmem, size = 0x9000, scoped, tag = 'internal scratch']
  %s0 = inlined_call_operand.hbm [shape: f32[8,32], index: 0, kind: input, shape index: {}]
  %s1 = inlined_call_operand.hbm [shape: f32[32,128], index: 1, kind: input, shape index: {}]
  %s2 = inlined_call_operand.vmem [shape: f32[1,128], index: 2, kind: input, shape index: {}]
  %s3 = inlined_call_operand.hbm [shape: f32[128,128], index: 3, kind: input, shape index: {}]
  %s4 = inlined_call_operand.vmem [shape: f32[1,128], index: 4, kind: input, shape index: {}]
  %s5 = inlined_call_operand.hbm [shape: f32[8,128], index: 5, kind: output, shape index: {}]
  %s6 = sld [smem:[#allocation0]]
  $region42: #{tpu_custom_call.1} parent=0
    _
  %s8 = ssub.s32 1, %s6
  %s9 = scalar_select 0, %s8, %s6
  $region1: #{tpu_custom_call.1} parent=0
    #allocation2 [shape = 'u8[4096]{0}', space=vmem, size = 0x1000, scoped, tag = 'input window, operand 0, single buffered']
    #allocation3 [shape = 's32[1]{0}', space=sflag, size = 0x4, scoped, tag = 'scoped memory for tpu_custom_call.1']
    #allocation4 [shape = 's32[1]{0}', space=sflag, size = 0x4, scoped, tag = 'scoped memory for tpu_custom_call.1']
    #allocation5 [shape = 'u8[16384]{0}', space=vmem, size = 0x4000, scoped, tag = 'input window, operand 1, single buffered']
    #allocation6 [shape = 's32[1]{0}', space=sflag, size = 0x4, scoped, tag = 'scoped memory for tpu_custom_call.1']
    #allocation7 [shape = 'u8[65536]{0}', space=vmem, size = 0x10000, scoped, tag = 'input window, operand 3, single buffered']
    #allocation8 [shape = 'u8[4096]{0}', space=vmem, size = 0x1000, scoped, tag = 'output window, operand 0, single buffered']
    %10 = vsyncpa [#allocation3], 0
    %11 = vsyncpa [#allocation6], 0
    %12 = vsyncpa [#allocation4], 0
    // Predicated region
    $region2: #{tpu_custom_call.1} parent=1 // pred_check
      _
    $region3: #{tpu_custom_call.1} parent=1 // pred_check_branch
      %14 = sbr.rel (0) target = $region5
    $region4: #{tpu_custom_call.1} parent=1 // pred_region
      %16 = vsyncadd [#allocation3], 0
      %s18 = sshll.u32 %s0, 4
      %s19 = int_to_ptr.hbm [resolvable:$true] %s18
      %s20 = sshll.u32 [#allocation2], 4
      %s21 = int_to_ptr.vmem [resolvable:$true] %s20
      %23 = dma.hbm_to_vmem [thread:$0]  %s19, 128, %s21, [#allocation3]
    $region5: #{tpu_custom_call.1} parent=1 // pred_fallthru
      _
    // Predicated region
    $region6: #{tpu_custom_call.1} parent=1 // pred_check
      _
    $region7: #{tpu_custom_call.1} parent=1 // pred_check_branch
      %25 = sbr.rel (0) target = $region9
    $region8: #{tpu_custom_call.1} parent=1 // pred_region
      %27 = vsyncadd [#allocation6], 0
      %s28 = sshll.u32 %s1, 4
      %s29 = int_to_ptr.hbm [resolvable:$true] %s28
      %s30 = sshll.u32 [#allocation5], 4
      %s31 = int_to_ptr.vmem [resolvable:$true] %s30
      %36 = dma.hbm_to_vmem [thread:$0]  %s29, 512, %s31, [#allocation6], 128, 128, 8
    $region9: #{tpu_custom_call.1} parent=1 // pred_fallthru
      _
    // Predicated region
    $region10: #{tpu_custom_call.1} parent=1 // pred_check
      _
    $region11: #{tpu_custom_call.1} parent=1 // pred_check_branch
      %38 = sbr.rel (0) target = $region13
    $region12: #{tpu_custom_call.1} parent=1 // pred_region
      _
    $region13: #{tpu_custom_call.1} parent=1 // pred_fallthru
      _
    // Predicated region
    $region14: #{tpu_custom_call.1} parent=1 // pred_check
      _
    $region15: #{tpu_custom_call.1} parent=1 // pred_check_branch
      %40 = sbr.rel (0) target = $region17
    $region16: #{tpu_custom_call.1} parent=1 // pred_region
      %42 = vsyncadd [#allocation6], 0
      %s43 = sshll.u32 %s3, 4
      %s44 = int_to_ptr.hbm [resolvable:$true] %s43
      %s45 = sshll.u32 [#allocation7], 4
      %s46 = int_to_ptr.vmem [resolvable:$true] %s45
      %51 = dma.hbm_to_vmem [thread:$0]  %s44, 2048, %s46, [#allocation6], 128, 128, 8
    $region17: #{tpu_custom_call.1} parent=1 // pred_fallthru
      _
    // Predicated region
    $region18: #{tpu_custom_call.1} parent=1 // pred_check
      _
    $region19: #{tpu_custom_call.1} parent=1 // pred_check_branch
      %53 = sbr.rel (0) target = $region21
    $region20: #{tpu_custom_call.1} parent=1 // pred_region
      _
    $region21: #{tpu_custom_call.1} parent=1 // pred_fallthru
      _
    // Predicated region
    $region22: #{tpu_custom_call.1} parent=1 // pred_check
      _
    $region23: #{tpu_custom_call.1} parent=1 // pred_check_branch
      %55 = sbr.rel (0) target = $region25
    $region24: #{tpu_custom_call.1} parent=1 // pred_region
      %57 = dma.done [#allocation3], 128
    $region25: #{tpu_custom_call.1} parent=1 // pred_fallthru
      _
    // Predicated region
    $region26: #{tpu_custom_call.1} parent=1 // pred_check
      _
    $region27: #{tpu_custom_call.1} parent=1 // pred_check_branch
      %59 = sbr.rel (0) target = $region29
    $region28: #{tpu_custom_call.1} parent=1 // pred_region
      %61 = dma.done [#allocation6], 512
    $region29: #{tpu_custom_call.1} parent=1 // pred_fallthru
      _
    // Predicated region
    $region30: #{tpu_custom_call.1} parent=1 // pred_check
      _
    $region31: #{tpu_custom_call.1} parent=1 // pred_check_branch
      %63 = sbr.rel (0) target = $region33
    $region32: #{tpu_custom_call.1} parent=1 // pred_region
      %65 = dma.done [#allocation6], 2048
    $region33: #{tpu_custom_call.1} parent=1 // pred_fallthru
      _
    %v66 = vld [vmem:[#allocation2] sm:$0xff]
    %v67 = vld [vmem:[#allocation5] sm:$0xff]
    %v68 = vld [vmem:[#allocation5 + $0x8] sm:$0xff]
    %v69 = vld [vmem:[#allocation5 + $0x10] sm:$0xff]
    %v70 = vld [vmem:[#allocation5 + $0x18] sm:$0xff]
    %v71 = vld [vmem:[%s2] sm:$0x1]
    %v73 = vperm.slane %v71, 0
    %vm75 = vcmask 261120
    %v77 = vsel %vm75, %v66, 0
    %79 = vmatpush.msra.mxu0 0.0
    %80 = vmatpush.msra.mxu0 0.0
    %81 = vmatpush.msra.mxu0 0.0
    %82 = vmatpush.msra.mxu0 0.0
    %83 = vmatpush.msra.mxu0 0.0
    %84 = vmatpush.msra.mxu0 0.0
    %85 = vmatpush.msra.mxu0 0.0
    %86 = vmatpush.msra.mxu0 0.0
    %87 = vmatpush.msra.mxu0 0.0
    %88 = vmatpush.msra.mxu0 0.0
    %89 = vmatpush.msra.mxu0 0.0
    %90 = vmatpush.msra.mxu0 0.0
    %91 = vmatpush.msra.mxu0 %v70
    %92 = vmatpush.msra.mxu0 %v69
    %93 = vmatpush.msra.mxu0 %v68
    %94 = vmatpush.msra.mxu0 %v67
    %95 = vmatmul.f32.gmra.mxu0 %v77
    %v96 = vpop.f32.mrf.mxu0
    %v97 = vadd.f32 %v73, %v96
    %98 = vdwg.mxu0
    %v99 = vmul.f32 %v97, 0.5
    %v100 = vmul.f32 %v97, 0.70710677
    %v101 = vmul.f32 %v100, %v100
    %v102 = vmin.f32 16.0, %v101
    %v103 = vmul.f32 %v102, 2.1237322e-06
    %v104 = vadd.f32 %v103, 0.00028619796
    %v105 = vmul.f32 %v102, %v104
    %v106 = vadd.f32 %v105, 0.0036580483
    %v107 = vmul.f32 %v102, %v106
    %v108 = vadd.f32 %v107, 0.05243302
    %v109 = vmul.f32 %v102, %v108
    %v110 = vadd.f32 %v109, 0.18741608
    %v111 = vmul.f32 %v102, %v110
    %v112 = vadd.f32 %v111, 1.1283791
    %v113 = vmul.f32 %v100, %v112
    %v114 = vmul.f32 %v102, 3.8918573e-05
    %v115 = vadd.f32 %v114, 0.001143296
    %v116 = vmul.f32 %v102, %v115
    %v117 = vadd.f32 %v116, 0.014752088
    %v118 = vmul.f32 %v102, %v117
    %v119 = vadd.f32 %v118, 0.112945676
    %v120 = vmul.f32 %v102, %v119
    %v121 = vadd.f32 %v120, 0.4994258
    %v122 = vmul.f32 %v102, %v121
    %v123 = vadd.f32 %v122, 1.0
    %v124 = vrcp.pop %v123
    %v125 = vmul.f32 %v123, %v124
    %v126 = vsub.f32 1.0, %v125
    %v127 = vmul.f32 %v124, %v126
    %v128 = vadd.f32 %v124, %v127
    %vm129 = vweird.f32 %v123
    %vm130 = vweird.f32 %v124
    %vm131 = vmor %vm129, %vm130
    %v132 = vsel %vm131, %v124, %v128
    %v133 = vand.u32 2147483647, %v123
    %vm134 = vcmp.eq.f32.partialorder %v133, 8.507059e+37
    %v135 = vand.u32 %v123, 2147483648
    %v136 = vor.u32 1.1754944e-38, %v135
    %v137 = vsel %vm134, %v136, %v132
    %v138 = vmul.f32 %v113, %v137
    %v139 = vmin.f32 %v138, 1.0
    %v140 = vmax.f32 %v139, -1.0
    %v141 = vadd.f32 %v140, 1.0
    %v142 = vmul.f32 %v99, %v141
    %v143 = vld [vmem:[#allocation7] sm:$0xff]
    %v144 = vld [vmem:[#allocation7 + $0x8] sm:$0xff]
    %v145 = vld [vmem:[#allocation7 + $0x10] sm:$0xff]
    %v146 = vld [vmem:[#allocation7 + $0x18] sm:$0xff]
    %v147 = vld [vmem:[#allocation7 + $0x20] sm:$0xff]
    %v148 = vld [vmem:[#allocation7 + $0x28] sm:$0xff]
    %v149 = vld [vmem:[#allocation7 + $0x30] sm:$0xff]
    %v150 = vld [vmem:[#allocation7 + $0x38] sm:$0xff]
    %v151 = vld [vmem:[#allocation7 + $0x40] sm:$0xff]
    %v152 = vld [vmem:[#allocation7 + $0x48] sm:$0xff]
    %v153 = vld [vmem:[#allocation7 + $0x50] sm:$0xff]
    %v154 = vld [vmem:[#allocation7 + $0x58] sm:$0xff]
    %v155 = vld [vmem:[#allocation7 + $0x60] sm:$0xff]
    %v156 = vld [vmem:[#allocation7 + $0x68] sm:$0xff]
    %v157 = vld [vmem:[#allocation7 + $0x70] sm:$0xff]
    %v158 = vld [vmem:[#allocation7 + $0x78] sm:$0xff]
    %v159 = vld [vmem:[%s4] sm:$0x1]
    %v161 = vperm.slane %v159, 0
    %163 = vmatpush.msra.mxu0 %v158
    %164 = vmatpush.msra.mxu0 %v157
    %165 = vmatpush.msra.mxu0 %v156
    %166 = vmatpush.msra.mxu0 %v155
    %167 = vmatpush.msra.mxu0 %v154
    %168 = vmatpush.msra.mxu0 %v153
    %169 = vmatpush.msra.mxu0 %v152
    %170 = vmatpush.msra.mxu0 %v151
    %171 = vmatpush.msra.mxu0 %v150
    %172 = vmatpush.msra.mxu0 %v149
    %173 = vmatpush.msra.mxu0 %v148
    %174 = vmatpush.msra.mxu0 %v147
    %175 = vmatpush.msra.mxu0 %v146
    %176 = vmatpush.msra.mxu0 %v145
    %177 = vmatpush.msra.mxu0 %v144
    %178 = vmatpush.msra.mxu0 %v143
    %179 = vmatmul.f32.gmra.mxu0 %v142
    %v180 = vpop.f32.mrf.mxu0
    %v181 = vadd.f32 %v161, %v180
    %182 = vdwg.mxu0
    %v183 = vmul.f32 %v181, 0.5
    %v184 = vmul.f32 %v181, 0.70710677
    %v185 = vmul.f32 %v184, %v184
    %v186 = vmin.f32 16.0, %v185
    %v187 = vmul.f32 %v186, 2.1237322e-06
    %v188 = vadd.f32 %v187, 0.00028619796
    %v189 = vmul.f32 %v186, %v188
    %v190 = vadd.f32 %v189, 0.0036580483
    %v191 = vmul.f32 %v186, %v190
    %v192 = vadd.f32 %v191, 0.05243302
    %v193 = vmul.f32 %v186, %v192
    %v194 = vadd.f32 %v193, 0.18741608
    %v195 = vmul.f32 %v186, %v194
    %v196 = vadd.f32 %v195, 1.1283791
    %v197 = vmul.f32 %v184, %v196
    %v198 = vmul.f32 %v186, 3.8918573e-05
    %v199 = vadd.f32 %v198, 0.001143296
    %v200 = vmul.f32 %v186, %v199
    %v201 = vadd.f32 %v200, 0.014752088
    %v202 = vmul.f32 %v186, %v201
    %v203 = vadd.f32 %v202, 0.112945676
    %v204 = vmul.f32 %v186, %v203
    %v205 = vadd.f32 %v204, 0.4994258
    %v206 = vmul.f32 %v186, %v205
    %v207 = vadd.f32 %v206, 1.0
    %v208 = vrcp.pop %v207
    %v209 = vmul.f32 %v207, %v208
    %v210 = vsub.f32 1.0, %v209
    %v211 = vmul.f32 %v208, %v210
    %v212 = vadd.f32 %v208, %v211
    %vm213 = vweird.f32 %v207
    %vm214 = vweird.f32 %v208
    %vm215 = vmor %vm213, %vm214
    %v216 = vsel %vm215, %v208, %v212
    %v217 = vand.u32 2147483647, %v207
    %vm218 = vcmp.eq.f32.partialorder %v217, 8.507059e+37
    %v219 = vand.u32 %v207, 2147483648
    %v220 = vor.u32 1.1754944e-38, %v219
    %v221 = vsel %vm218, %v220, %v216
    %v222 = vmul.f32 %v197, %v221
    %v223 = vmin.f32 %v222, 1.0
    %v224 = vmax.f32 %v223, -1.0
    %v225 = vadd.f32 %v224, 1.0
    %v226 = vmul.f32 %v183, %v225
    %v227 = vlaneseq
    %v228 = vand.u32 %v227, 127
    %vm229 = vcmp.lt.s32.totalorder %v228, 10
    %v230 = vsel %vm229, %v226, -1e+30
    %231 = vmax.xlane.f32.xlu0 %v230
    %v232 = vpop.xlane.xlu0 %231
    %v233 = vsub.f32 %v230, %v232
    %v234 = vmul.f32 %v233, 1.442695
    %v235 = vpow.pop %v234
    %236 = vadd.xlane.f32.xlu0 %v235
    %v237 = vpop.xlane.xlu0 %236
    %v238 = vrcp.pop %v237
    %v239 = vmul.f32 %v235, %v238
    %240 = vst [vmem:[#allocation8] sm:$0xff] %v239
    // Predicated region
    $region34: #{tpu_custom_call.1} parent=1 // pred_check
      _
    $region35: #{tpu_custom_call.1} parent=1 // pred_check_branch
      %242 = sbr.rel (0) target = $region37
    $region36: #{tpu_custom_call.1} parent=1 // pred_region
      %244 = vsyncadd [#allocation4], 0
      %s246 = sshll.u32 [#allocation8], 4
      %s247 = int_to_ptr.vmem [resolvable:$true] %s246
      %s248 = sshll.u32 %s5, 4
      %s249 = int_to_ptr.hbm [resolvable:$true] %s248
      %251 = dma.vmem_to_hbm [thread:$0]  %s247, 128, %s249, [#allocation4]
    $region37: #{tpu_custom_call.1} parent=1 // pred_fallthru
      _
    // Predicated region
    $region38: #{tpu_custom_call.1} parent=1 // pred_check
      _
    $region39: #{tpu_custom_call.1} parent=1 // pred_check_branch
      %253 = sbr.rel (0) target = $region41
    $region40: #{tpu_custom_call.1} parent=1 // pred_region
      %255 = dma.done [#allocation4], 128
    $region41: #{tpu_custom_call.1} parent=1 // pred_fallthru
      _
    %256 = vsyncpa [#allocation3], 1
    %257 = vsyncpa [#allocation6], 1
    %258 = vsyncpa [#allocation4], 1

</llo_original>
